<compile_context>
chip_gen: v7x
topology: tpu7x:2x2x1
jax: 0.10.0
libtpu: 0.0.40
codegen_flags: <defaults>
</compile_context>

<pallas_src>
import numpy as np
import jax
import jax.numpy as jnp
from jax.experimental import pallas as pl
from jax.experimental.pallas import tpu as pltpu


_VMEM_BUDGET = 40 * 1024 * 1024  # conservative scoped-VMEM target (v7x: 64 MiB physical)


# ----------------------------------------------------------------------------
# Positional tables (numpy, trace-time constants)
# ----------------------------------------------------------------------------
def _sincos_1d(embed_dim, pos):
    """MAE get_1d_sincos_pos_embed_from_grid."""
    assert embed_dim % 2 == 0
    omega = np.arange(embed_dim // 2, dtype=np.float64)
    omega /= embed_dim / 2.0
    omega = 1.0 / 10000 ** omega
    out = np.einsum("m,d->md", pos.reshape(-1).astype(np.float64), omega)
    return np.concatenate([np.sin(out), np.cos(out)], axis=1)  # (M, D)


def get_2d_sincos_pos_embed_rect(embed_dim, n_rows, n_cols):
    """Rectangular 2-D sincos table.  Entry [i, j, :] is bit-identical to
    get_2d_sincos_pos_embed(embed_dim, G).reshape(G, G, -1)[i, j, :] for any
    G > max(i, j), so this replaces slicing the 900x900 parameter."""
    grid_w = np.arange(n_cols, dtype=np.float32)
    grid_h = np.arange(n_rows, dtype=np.float32)
    w_mesh, h_mesh = np.meshgrid(grid_w, grid_h)  # (n_rows, n_cols), xy index
    emb = np.concatenate(
        [_sincos_1d(embed_dim // 2, w_mesh), _sincos_1d(embed_dim // 2, h_mesh)],
        axis=1,
    )
    return emb.reshape(n_rows, n_cols, embed_dim)


def get_2d_sincos_pos_embed(embed_dim, grid_size, cls_token=False):
    emb = get_2d_sincos_pos_embed_rect(embed_dim, grid_size, grid_size)
    emb = emb.reshape(grid_size * grid_size, embed_dim)
    if cls_token:
        emb = np.concatenate([np.zeros([1, embed_dim]), emb], axis=0)
    return emb


def get_1d_vaswani_pos_encoding(max_len, d_model):
    """Classic transformer PositionalEncoding table (sin on even, cos on odd)."""
    pe = np.zeros((max_len, d_model), dtype=np.float64)
    position = np.arange(max_len, dtype=np.float64)[:, None]
    div_term = np.exp(
        np.arange(0, d_model, 2, dtype=np.float64) * (-np.log(10000.0) / d_model)
    )
    pe[:, 0::2] = np.sin(position * div_term)
    pe[:, 1::2] = np.cos(position * div_term)
    return pe


# ----------------------------------------------------------------------------
# Pallas kernels
# ----------------------------------------------------------------------------
def _make_fused_kernel(n_streams):
    """Kernel over refs = (x_0..x_{n-1}, pos_0..pos_{n-1}, o_0..o_{n-1}).
    Each stream: o_i = x_i + pos_i broadcast over the batch block."""

    def kernel(*refs):
        for i in range(n_streams):  # static unroll, handful of streams
            x = refs[i][...].astype(jnp.float32)
            p = refs[n_streams + i][...].astype(jnp.float32)
            o_ref = refs[2 * n_streams + i]
            o_ref[...] = (x + p[None, :, :]).astype(o_ref.dtype)

    return kernel


def _tiled_kernel(x_ref, p_ref, o_ref):
    x = x_ref[...].astype(jnp.float32)
    p = p_ref[...].astype(jnp.float32)
    o_ref[...] = (x + p[None, :, :]).astype(o_ref.dtype)


def _round_up(x, m):
    return (x + m - 1) // m * m


def _add_pos_tiled(x, pos):
    """Fallback for very large streams: tile L, grid (L_tiles, B); the pos tile
    index_map is invariant across the inner batch axis so it stays resident."""
    B, L, D = x.shape
    pos = pos.astype(x.dtype)
    itemsize = jnp.dtype(x.dtype).itemsize
    sub = 16 if x.dtype == jnp.bfloat16 else 8

    rows_budget = max(sub, _VMEM_BUDGET // (6 * D * itemsize))
    max_rows = max(sub, min(1024, (rows_budget // sub) * sub))
    n_tiles = max(1, -(-L // max_rows))
    tl = _round_up(-(-L // n_tiles), sub)
    l_pad = n_tiles * tl
    if l_pad != L:  # pad -> unmasked stores inside the kernel
        x = jnp.pad(x, ((0, 0), (0, l_pad - L), (0, 0)))
        pos = jnp.pad(pos, ((0, l_pad - L), (0, 0)))

    out = pl.pallas_call(
        _tiled_kernel,
        out_shape=jax.ShapeDtypeStruct((B, l_pad, D), x.dtype),
        grid=(n_tiles, B),  # L outer, batch inner -> pos tile read once per L tile
        in_specs=[
            pl.BlockSpec((1, tl, D), lambda l, b: (b, l, 0)),
            pl.BlockSpec((tl, D), lambda l, b: (l, 0)),  # invariant across b
        ],
        out_specs=pl.BlockSpec((1, tl, D), lambda l, b: (b, l, 0)),
        compiler_params=pltpu.CompilerParams(
            dimension_semantics=("parallel", "parallel"),
            vmem_limit_bytes=_VMEM_BUDGET,
        ),
    )(x, pos)

    if l_pad != L:
        out = out[:, :L, :]
    return out


def add_pos_multi(xs, ps):
    """out_i = x_i + pos_i[None] for every stream, in ONE pallas_call.

    xs: list of (B, L_i, D) activations; ps: list of (L_i, D) tables.
    No concatenation / padding: each stream gets its own refs & BlockSpecs.
    """
    n = len(xs)
    B, _, D = xs[0].shape
    for x in xs:
        assert x.shape[0] == B and x.shape[-1] == D
    ps = [p.astype(x.dtype) for x, p in zip(xs, ps)]

    itemsize = max(jnp.dtype(x.dtype).itemsize for x in xs)
    row_bytes = sum(x.shape[1] for x in xs) * D * itemsize  # one batch row, all streams

    # VMEM ~= (4*bb + 2) * row_bytes  (x & out double-buffered per step; pos
    # double-buffered once, its block index is batch-invariant).
    if 6 * row_bytes > _VMEM_BUDGET:
        # A single batch row of all streams does not fit: per-stream L tiling.
        return [_add_pos_tiled(x, p) for x, p in zip(xs, ps)]

    max_bb = max(1, min(B, (_VMEM_BUDGET // row_bytes - 2) // 4))
    bb = max_bb
    while B % bb:  # largest divisor of B not exceeding the VMEM-derived bound
        bb -= 1

    in_specs = (
        [pl.BlockSpec((bb, x.shape[1], D), lambda b: (b, 0, 0)) for x in xs]
        + [pl.BlockSpec((p.shape[0], D), lambda b: (0, 0)) for p in ps]
    )
    out_specs = tuple(
        pl.BlockSpec((bb, x.shape[1], D), lambda b: (b, 0, 0)) for x in xs
    )
    out_shape = tuple(jax.ShapeDtypeStruct(x.shape, x.dtype) for x in xs)

    outs = pl.pallas_call(
        _make_fused_kernel(n),
        out_shape=out_shape,
        grid=(B // bb,),
        in_specs=in_specs,
        out_specs=out_specs,
        compiler_params=pltpu.CompilerParams(
            dimension_semantics=("parallel",),
            vmem_limit_bytes=_VMEM_BUDGET,
        ),
    )(*xs, *ps)
    return list(outs)


# ----------------------------------------------------------------------------
# Module
# ----------------------------------------------------------------------------
class IndivPosEmbedding:
    """JAX/Pallas port of MulTiMAE IndivPosEmbedding (eval-mode forward)."""

    def __init__(self, config, d_model, dropout=0.0, dtype=jnp.float32):
        self.temporal_cols = ["global"] + list(config.temporal_cols)
        self.img_cols = list(config.img_cols)
        self.nlp_cols = list(config.nlp_cols)
        self.max_seq_len = config.MAX_SEQ_LEN
        self.d_model = d_model
        self.dtype = dtype
        self.img_pos_enc_2d = jnp.asarray(
            get_2d_sincos_pos_embed(d_model, 224 // config.patch_size, cls_token=True),
            dtype,
        )
        # TODO(synk): dropout inside PositionalEncoding is treated as eval-mode
        # identity; the training-time dropout mask is not implemented here.

    def _temporal_pos(self, n_time, n_cols):
        # Equivalent to temporal_pos_enc_2d[:n_time, :n_cols, :] without ever
        # materialising the 900x900xD parameter.
        return jnp.asarray(
            get_2d_sincos_pos_embed_rect(self.d_model, n_time, n_cols), self.dtype
        )

    def __call__(self, data_dict):
        # ---- gather streams (keep the original dict-iteration semantics) ----
        tvals = [v for k, v in data_dict.items() if k in self.temporal_cols]
        temporal_block = jnp.stack(tvals, axis=-2)  # (B, T, Ntc, D)
        B, T, Ntc, D = temporal_block.shape
        temporal_pos = self._temporal_pos(T, Ntc).reshape(T * Ntc, D)

        names, xs, ps = ["temporal_block"], [temporal_block.reshape(B, T * Ntc, D)], [temporal_pos]
        for col in self.img_cols:
            x = data_dict[col]
            assert x.shape[1] == self.img_pos_enc_2d.shape[0]
            names.append(col)
            xs.append(x)
            ps.append(self.img_pos_enc_2d)
        for col in self.nlp_cols:
            x = data_dict[col]
            pe = jnp.asarray(
                get_1d_vaswani_pos_encoding(x.shape[1], x.shape[-1]), x.dtype
            )
            names.append(col)
            xs.append(x)
            ps.append(pe)

        # ---- single fused pallas_call over all streams -----------------------
        outs = add_pos_multi(xs, ps)

        result = {}
        for name, y in zip(names, outs):
            if name == "temporal_block":
                y = y.reshape(B, T, Ntc, D)
            result[name] = y
        return result


# ----------------------------------------------------------------------------
# Demo / self-check
# ----------------------------------------------------------------------------
if __name__ == "__main__":
    from types import SimpleNamespace

    config = SimpleNamespace(
        temporal_cols=["open", "high", "low"],
        img_cols=["rgb"],
        nlp_cols=["headline"],
        MAX_SEQ_LEN=32,
        patch_size=56,  # 224 // 56 = 4  ->  17 image tokens (incl. cls)
    )
    d_model = 128
    B, T = 2, 6
    n_img_tok = (224 // config.patch_size) ** 2 + 1  # 17
    n_nlp_tok = 9

    key = jax.random.PRNGKey(0)
    keys = jax.random.split(key, 6)
    data_dict = {
        "global": jax.random.normal(keys[0], (B, T, d_model), jnp.float32),
        "open": jax.random.normal(keys[1], (B, T, d_model), jnp.float32),
        "high": jax.random.normal(keys[2], (B, T, d_model), jnp.float32),
        "low": jax.random.normal(keys[3], (B, T, d_model), jnp.float32),
        "rgb": jax.random.normal(keys[4], (B, n_img_tok, d_model), jnp.float32),
        "headline": jax.random.normal(keys[5], (B, n_nlp_tok, d_model), jnp.float32),
    }

    model = IndivPosEmbedding(config, d_model, dropout=0.1)
    result = jax.block_until_ready(model(data_dict))

    # Pure-jnp reference check of the forward semantics.
    tvals = [v for k, v in data_dict.items() if k in model.temporal_cols]
    tb = jnp.stack(tvals, axis=-2)
    ref = {
        "temporal_block": tb + model._temporal_pos(T, tb.shape[2]),
        "rgb": data_dict["rgb"] + model.img_pos_enc_2d,
        "headline": data_dict["headline"]
        + jnp.asarray(get_1d_vaswani_pos_encoding(n_nlp_tok, d_model), jnp.float32),
    }
    for k in ref:
        err = float(jnp.max(jnp.abs(result[k] - ref[k])))
        assert err < 1e-5, (k, err)
    assert result["temporal_block"].shape == (B, T, 4, d_model)

    print("KERNEL_OK")
</pallas_src>

<mosaic_0001>
module attributes {stable_mosaic.version = 11 : i64} {
  func.func @kernel(%arg0: i32, %arg1: memref<2x24x128xf32, #tpu.memory_space<vmem>>, %arg2: memref<2x17x128xf32, #tpu.memory_space<vmem>>, %arg3: memref<2x9x128xf32, #tpu.memory_space<vmem>>, %arg4: memref<24x128xf32, #tpu.memory_space<vmem>>, %arg5: memref<17x128xf32, #tpu.memory_space<vmem>>, %arg6: memref<9x128xf32, #tpu.memory_space<vmem>>, %arg7: memref<2x24x128xf32, #tpu.memory_space<vmem>>, %arg8: memref<2x17x128xf32, #tpu.memory_space<vmem>>, %arg9: memref<2x9x128xf32, #tpu.memory_space<vmem>>) attributes {dimension_semantics = [#tpu.dimension_semantics<parallel>], iteration_bounds = array<i64: 1>, scalar_prefetch = 0 : i64, scratch_operands = 0 : i64, tpu.core_type = #tpu.core_type<tc>, window_params = [{transform_indices = @transform_0, window_bounds = array<i64: 2, 24, 128>}, {transform_indices = @transform_1, window_bounds = array<i64: 2, 17, 128>}, {transform_indices = @transform_2, window_bounds = array<i64: 2, 9, 128>}, {pipeline_mode = #tpu.pipeline_mode<synchronous>, transform_indices = @transform_3, window_bounds = array<i64: 24, 128>}, {pipeline_mode = #tpu.pipeline_mode<synchronous>, transform_indices = @transform_4, window_bounds = array<i64: 17, 128>}, {pipeline_mode = #tpu.pipeline_mode<synchronous>, transform_indices = @transform_5, window_bounds = array<i64: 9, 128>}, {transform_indices = @transform_6, window_bounds = array<i64: 2, 24, 128>}, {transform_indices = @transform_7, window_bounds = array<i64: 2, 17, 128>}, {transform_indices = @transform_8, window_bounds = array<i64: 2, 9, 128>}]} {
    %c0 = arith.constant 0 : index
    %c0_0 = arith.constant 0 : index
    %c0_1 = arith.constant 0 : index
    %0 = vector.load %arg1[%c0, %c0_0, %c0_1] : memref<2x24x128xf32, #tpu.memory_space<vmem>>, vector<2x24x128xf32>
    %c0_2 = arith.constant 0 : index
    %c0_3 = arith.constant 0 : index
    %1 = vector.load %arg4[%c0_2, %c0_3] : memref<24x128xf32, #tpu.memory_space<vmem>>, vector<24x128xf32>
    %2 = vector.shape_cast %1 : vector<24x128xf32> to vector<1x24x128xf32>
    %3 = vector.broadcast %2 : vector<1x24x128xf32> to vector<2x24x128xf32>
    %4 = arith.addf %0, %3 : vector<2x24x128xf32>
    %c0_4 = arith.constant 0 : index
    %c0_5 = arith.constant 0 : index
    %c0_6 = arith.constant 0 : index
    %5 = vector.load %arg7[%c0_4, %c0_5, %c0_6] : memref<2x24x128xf32, #tpu.memory_space<vmem>>, vector<2x24x128xf32>
    tpu.vector_store %arg7[%c0_4, %c0_5, %c0_6], %4 {strides = array<i32>} : memref<2x24x128xf32, #tpu.memory_space<vmem>>, vector<2x24x128xf32>,
    %c0_7 = arith.constant 0 : index
    %c0_8 = arith.constant 0 : index
    %c0_9 = arith.constant 0 : index
    %6 = vector.load %arg2[%c0_7, %c0_8, %c0_9] : memref<2x17x128xf32, #tpu.memory_space<vmem>>, vector<2x17x128xf32>
    %c0_10 = arith.constant 0 : index
    %c0_11 = arith.constant 0 : index
    %7 = vector.load %arg5[%c0_10, %c0_11] : memref<17x128xf32, #tpu.memory_space<vmem>>, vector<17x128xf32>
    %8 = vector.shape_cast %7 : vector<17x128xf32> to vector<1x17x128xf32>
    %9 = vector.broadcast %8 : vector<1x17x128xf32> to vector<2x17x128xf32>
    %10 = arith.addf %6, %9 : vector<2x17x128xf32>
    %c0_12 = arith.constant 0 : index
    %c0_13 = arith.constant 0 : index
    %c0_14 = arith.constant 0 : index
    %11 = vector.load %arg8[%c0_12, %c0_13, %c0_14] : memref<2x17x128xf32, #tpu.memory_space<vmem>>, vector<2x17x128xf32>
    tpu.vector_store %arg8[%c0_12, %c0_13, %c0_14], %10 {strides = array<i32>} : memref<2x17x128xf32, #tpu.memory_space<vmem>>, vector<2x17x128xf32>,
    %c0_15 = arith.constant 0 : index
    %c0_16 = arith.constant 0 : index
    %c0_17 = arith.constant 0 : index
    %12 = vector.load %arg3[%c0_15, %c0_16, %c0_17] : memref<2x9x128xf32, #tpu.memory_space<vmem>>, vector<2x9x128xf32>
    %c0_18 = arith.constant 0 : index
    %c0_19 = arith.constant 0 : index
    %13 = vector.load %arg6[%c0_18, %c0_19] : memref<9x128xf32, #tpu.memory_space<vmem>>, vector<9x128xf32>
    %14 = vector.shape_cast %13 : vector<9x128xf32> to vector<1x9x128xf32>
    %15 = vector.broadcast %14 : vector<1x9x128xf32> to vector<2x9x128xf32>
    %16 = arith.addf %12, %15 : vector<2x9x128xf32>
    %c0_20 = arith.constant 0 : index
    %c0_21 = arith.constant 0 : index
    %c0_22 = arith.constant 0 : index
    %17 = vector.load %arg9[%c0_20, %c0_21, %c0_22] : memref<2x9x128xf32, #tpu.memory_space<vmem>>, vector<2x9x128xf32>
    tpu.vector_store %arg9[%c0_20, %c0_21, %c0_22], %16 {strides = array<i32>} : memref<2x9x128xf32, #tpu.memory_space<vmem>>, vector<2x9x128xf32>,
    return
  }
  func.func @transform_0(%arg0: i32) -> (i32, i32, i32) {
    %c0_i32 = arith.constant 0 : i32
    %c0_i32_0 = arith.constant 0 : i32
    %c0_i32_1 = arith.constant 0 : i32
    return %arg0, %c0_i32, %c0_i32_0 : i32, i32, i32
  }
  func.func @transform_1(%arg0: i32) -> (i32, i32, i32) {
    %c0_i32 = arith.constant 0 : i32
    %c0_i32_0 = arith.constant 0 : i32
    %c0_i32_1 = arith.constant 0 : i32
    return %arg0, %c0_i32, %c0_i32_0 : i32, i32, i32
  }
  func.func @transform_2(%arg0: i32) -> (i32, i32, i32) {
    %c0_i32 = arith.constant 0 : i32
    %c0_i32_0 = arith.constant 0 : i32
    %c0_i32_1 = arith.constant 0 : i32
    return %arg0, %c0_i32, %c0_i32_0 : i32, i32, i32
  }
  func.func @transform_3(%arg0: i32) -> (i32, i32) {
    %c0_i32 = arith.constant 0 : i32
    %c0_i32_0 = arith.constant 0 : i32
    %c0_i32_1 = arith.constant 0 : i32
    return %c0_i32, %c0_i32_0 : i32, i32
  }
  func.func @transform_4(%arg0: i32) -> (i32, i32) {
    %c0_i32 = arith.constant 0 : i32
    %c0_i32_0 = arith.constant 0 : i32
    %c0_i32_1 = arith.constant 0 : i32
    return %c0_i32, %c0_i32_0 : i32, i32
  }
  func.func @transform_5(%arg0: i32) -> (i32, i32) {
    %c0_i32 = arith.constant 0 : i32
    %c0_i32_0 = arith.constant 0 : i32
    %c0_i32_1 = arith.constant 0 : i32
    return %c0_i32, %c0_i32_0 : i32, i32
  }
  func.func @transform_6(%arg0: i32) -> (i32, i32, i32) {
    %c0_i32 = arith.constant 0 : i32
    %c0_i32_0 = arith.constant 0 : i32
    %c0_i32_1 = arith.constant 0 : i32
    return %arg0, %c0_i32, %c0_i32_0 : i32, i32, i32
  }
  func.func @transform_7(%arg0: i32) -> (i32, i32, i32) {
    %c0_i32 = arith.constant 0 : i32
    %c0_i32_0 = arith.constant 0 : i32
    %c0_i32_1 = arith.constant 0 : i32
    return %arg0, %c0_i32, %c0_i32_0 : i32, i32, i32
  }
  func.func @transform_8(%arg0: i32) -> (i32, i32, i32) {
    %c0_i32 = arith.constant 0 : i32
    %c0_i32_0 = arith.constant 0 : i32
    %c0_i32_1 = arith.constant 0 : i32
    return %arg0, %c0_i32, %c0_i32_0 : i32, i32, i32
  }
}

</mosaic_0001>

<llo_original>
// kernel: tpu_custom_call.1
$region0: #{tpu_custom_call.1}
  #allocation0 [shape = 'u32[]', space=smem, size = 0x4, offset = 0x4, fixed_abs, tag = 'smem constant byte address 0x4 - core index']
  #allocation1 [shape = 'u32[144,128]{1,0:T(1,128)}', space=vmem, size = 0x12000, scoped, tag = 'internal scratch']
  %s0 = inlined_call_operand.vmem [shape: f32[2,24,128], index: 0, kind: input, shape index: {}]
  %s1 = inlined_call_operand.vmem [shape: f32[2,17,128], index: 1, kind: input, shape index: {}]
  %s2 = inlined_call_operand.vmem [shape: f32[2,9,128], index: 2, kind: input, shape index: {}]
  %s3 = inlined_call_operand.vmem [shape: f32[24,128], index: 3, kind: input, shape index: {}]
  %s4 = inlined_call_operand.vmem [shape: f32[17,128], index: 4, kind: input, shape index: {}]
  %s5 = inlined_call_operand.vmem [shape: f32[9,128], index: 5, kind: input, shape index: {}]
  %s6 = inlined_call_operand.hbm [shape: f32[2,24,128], index: 6, kind: output, shape index: {0}]
  %s7 = inlined_call_operand.vmem [shape: f32[2,17,128], index: 7, kind: output, shape index: {1}]
  %s8 = inlined_call_operand.vmem [shape: f32[2,9,128], index: 8, kind: output, shape index: {2}]
  %9 = xla_tuple %s6, %s7, %s8
  %s10 = sld [smem:[#allocation0]]
  $region50: #{tpu_custom_call.1} parent=0
    _
  %s12 = ssub.s32 1, %s10
  %s13 = scalar_select 0, %s12, %s10
  $region1: #{tpu_custom_call.1} parent=0
    #allocation2 [shape = 'u8[24576]{0}', space=vmem, size = 0x6000, scoped, tag = 'output window, operand 0, single buffered']
    #allocation3 [shape = 's32[1]{0}', space=sflag, size = 0x4, scoped, tag = 'scoped memory for tpu_custom_call.1']
    %14 = vsyncpa [#allocation3], 0
    // Predicated region
    $region2: #{tpu_custom_call.1} parent=1 // pred_check
      _
    $region3: #{tpu_custom_call.1} parent=1 // pred_check_branch
      %16 = sbr.rel (0) target = $region5
    $region4: #{tpu_custom_call.1} parent=1 // pred_region
      _
    $region5: #{tpu_custom_call.1} parent=1 // pred_fallthru
      _
    // Predicated region
    $region6: #{tpu_custom_call.1} parent=1 // pred_check
      _
    $region7: #{tpu_custom_call.1} parent=1 // pred_check_branch
      %18 = sbr.rel (0) target = $region9
    $region8: #{tpu_custom_call.1} parent=1 // pred_region
      _
    $region9: #{tpu_custom_call.1} parent=1 // pred_fallthru
      _
    // Predicated region
    $region10: #{tpu_custom_call.1} parent=1 // pred_check
      _
    $region11: #{tpu_custom_call.1} parent=1 // pred_check_branch
      %20 = sbr.rel (0) target = $region13
    $region12: #{tpu_custom_call.1} parent=1 // pred_region
      _
    $region13: #{tpu_custom_call.1} parent=1 // pred_fallthru
      _
    // Predicated region
    $region14: #{tpu_custom_call.1} parent=1 // pred_check
      _
    $region15: #{tpu_custom_call.1} parent=1 // pred_check_branch
      %22 = sbr.rel (0) target = $region17
    $region16: #{tpu_custom_call.1} parent=1 // pred_region
      _
    $region17: #{tpu_custom_call.1} parent=1 // pred_fallthru
      _
    // Predicated region
    $region18: #{tpu_custom_call.1} parent=1 // pred_check
      _
    $region19: #{tpu_custom_call.1} parent=1 // pred_check_branch
      %24 = sbr.rel (0) target = $region21
    $region20: #{tpu_custom_call.1} parent=1 // pred_region
      _
    $region21: #{tpu_custom_call.1} parent=1 // pred_fallthru
      _
    // Predicated region
    $region22: #{tpu_custom_call.1} parent=1 // pred_check
      _
    $region23: #{tpu_custom_call.1} parent=1 // pred_check_branch
      %26 = sbr.rel (0) target = $region25
    $region24: #{tpu_custom_call.1} parent=1 // pred_region
      _
    $region25: #{tpu_custom_call.1} parent=1 // pred_fallthru
      _
    %v27 = vld [vmem:[%s0] sm:$0xff]
    %v28 = vld [vmem:[%s0 + $0x8] sm:$0xff]
    %v29 = vld [vmem:[%s0 + $0x10] sm:$0xff]
    %v30 = vld [vmem:[%s0 + $0x18] sm:$0xff]
    %v31 = vld [vmem:[%s0 + $0x20] sm:$0xff]
    %v32 = vld [vmem:[%s0 + $0x28] sm:$0xff]
    %v33 = vld [vmem:[%s3] sm:$0xff]
    %v34 = vld [vmem:[%s3 + $0x8] sm:$0xff]
    %v35 = vld [vmem:[%s3 + $0x10] sm:$0xff]
    %v36 = vadd.f32 %v27, %v33
    %v37 = vadd.f32 %v28, %v34
    %v38 = vadd.f32 %v29, %v35
    %v39 = vadd.f32 %v30, %v33
    %v40 = vadd.f32 %v31, %v34
    %v41 = vadd.f32 %v32, %v35
    %42 = vst [vmem:[#allocation2] sm:$0xff] %v36
    %43 = vst [vmem:[#allocation2 + $0x8] sm:$0xff] %v37
    %44 = vst [vmem:[#allocation2 + $0x10] sm:$0xff] %v38
    %45 = vst [vmem:[#allocation2 + $0x18] sm:$0xff] %v39
    %46 = vst [vmem:[#allocation2 + $0x20] sm:$0xff] %v40
    %47 = vst [vmem:[#allocation2 + $0x28] sm:$0xff] %v41
    %v48 = vld [vmem:[%s1] sm:$0xff]
    %v49 = vld [vmem:[%s1 + $0x8] sm:$0xff]
    %v50 = vld [vmem:[%s1 + $0x10] sm:$0x1]
    %v51 = vld [vmem:[%s1 + $0x18] sm:$0xff]
    %v52 = vld [vmem:[%s1 + $0x20] sm:$0xff]
    %v53 = vld [vmem:[%s1 + $0x28] sm:$0x1]
    %v54 = vld [vmem:[%s4] sm:$0xff]
    %v55 = vld [vmem:[%s4 + $0x8] sm:$0xff]
    %v56 = vld [vmem:[%s4 + $0x10] sm:$0x1]
    %v57 = vadd.f32 %v48, %v54
    %v58 = vadd.f32 %v49, %v55
    %v59 = vadd.f32 %v50, %v56
    %v60 = vadd.f32 %v51, %v54
    %v61 = vadd.f32 %v52, %v55
    %v62 = vadd.f32 %v53, %v56
    %63 = vst [vmem:[%s7] sm:$0xff] %v57
    %64 = vst [vmem:[%s7 + $0x8] sm:$0xff] %v58
    %65 = vst [vmem:[%s7 + $0x10] sm:$0x1] %v59
    %66 = vst [vmem:[%s7 + $0x18] sm:$0xff] %v60
    %67 = vst [vmem:[%s7 + $0x20] sm:$0xff] %v61
    %68 = vst [vmem:[%s7 + $0x28] sm:$0x1] %v62
    %v69 = vld [vmem:[%s2] sm:$0xff]
    %v70 = vld [vmem:[%s2 + $0x8] sm:$0x1]
    %v71 = vld [vmem:[%s2 + $0x10] sm:$0xff]
    %v72 = vld [vmem:[%s2 + $0x18] sm:$0x1]
    %v73 = vld [vmem:[%s5] sm:$0xff]
    %v74 = vld [vmem:[%s5 + $0x8] sm:$0x1]
    %v75 = vadd.f32 %v69, %v73
    %v76 = vadd.f32 %v70, %v74
    %v77 = vadd.f32 %v71, %v73
    %v78 = vadd.f32 %v72, %v74
    %79 = vst [vmem:[%s8] sm:$0xff] %v75
    %80 = vst [vmem:[%s8 + $0x8] sm:$0x1] %v76
    %81 = vst [vmem:[%s8 + $0x10] sm:$0xff] %v77
    %82 = vst [vmem:[%s8 + $0x18] sm:$0x1] %v78
    // Predicated region
    $region26: #{tpu_custom_call.1} parent=1 // pred_check
      _
    $region27: #{tpu_custom_call.1} parent=1 // pred_check_branch
      %84 = sbr.rel (0) target = $region29
    $region28: #{tpu_custom_call.1} parent=1 // pred_region
      %s86 = ssub.s32 768, 768
      %87 = vsyncadd [#allocation3], %s86
      %s88 = sshll.u32 [#allocation2], 4
      %s89 = int_to_ptr.vmem [resolvable:$true] %s88
      %94 = dma.vmem_to_hbm [thread:$0]  %s89, 768, %s6, [#allocation3], 128, 128, 8
    $region29: #{tpu_custom_call.1} parent=1 // pred_fallthru
      _
    // Predicated region
    $region30: #{tpu_custom_call.1} parent=1 // pred_check
      _
    $region31: #{tpu_custom_call.1} parent=1 // pred_check_branch
      %96 = sbr.rel (0) target = $region33
    $region32: #{tpu_custom_call.1} parent=1 // pred_region
      _
    $region33: #{tpu_custom_call.1} parent=1 // pred_fallthru
      _
    // Predicated region
    $region34: #{tpu_custom_call.1} parent=1 // pred_check
      _
    $region35: #{tpu_custom_call.1} parent=1 // pred_check_branch
      %98 = sbr.rel (0) target = $region37
    $region36: #{tpu_custom_call.1} parent=1 // pred_region
      _
    $region37: #{tpu_custom_call.1} parent=1 // pred_fallthru
      _
    // Predicated region
    $region38: #{tpu_custom_call.1} parent=1 // pred_check
      _
    $region39: #{tpu_custom_call.1} parent=1 // pred_check_branch
      %100 = sbr.rel (0) target = $region41
    $region40: #{tpu_custom_call.1} parent=1 // pred_region
      %101 = dma.done [#allocation3], 768
    $region41: #{tpu_custom_call.1} parent=1 // pred_fallthru
      _
    // Predicated region
    $region42: #{tpu_custom_call.1} parent=1 // pred_check
      _
    $region43: #{tpu_custom_call.1} parent=1 // pred_check_branch
      %103 = sbr.rel (0) target = $region45
    $region44: #{tpu_custom_call.1} parent=1 // pred_region
      _
    $region45: #{tpu_custom_call.1} parent=1 // pred_fallthru
      _
    // Predicated region
    $region46: #{tpu_custom_call.1} parent=1 // pred_check
      _
    $region47: #{tpu_custom_call.1} parent=1 // pred_check_branch
      %105 = sbr.rel (0) target = $region49
    $region48: #{tpu_custom_call.1} parent=1 // pred_region
      _
    $region49: #{tpu_custom_call.1} parent=1 // pred_fallthru
      _
    %106 = vsyncpa [#allocation3], 1

</llo_original>
